<compile_context>
chip_gen: v6e
topology: v6e:2x2x1
jax: 0.10.0
libtpu: 0.0.40
codegen_flags: <defaults>
</compile_context>

<pallas_src>
import jax
import jax.numpy as jnp
from jax.experimental import pallas as pl
from jax.experimental.pallas import tpu as pltpu


def _round_up(x, m):
    return ((x + m - 1) // m) * m


def _cosine_sim_kernel(x1_ref, x2_ref, o_ref, inv_n1_ref):
    # x1_ref: (tm, Dp)   x2_ref: (tn, Dp)   o_ref: (tm, tn)
    # inv_n1_ref: (tm, 1) VMEM scratch, cached across the j (N-tile) axis.
    j = pl.program_id(1)

    a = x1_ref[...]                                                  # (tm, Dp) f32
    b = x2_ref[...]                                                  # (tn, Dp) f32

    # The x1-tile norm depends only on i: compute once per row of output tiles.
    @pl.when(j == 0)
    def _():
        inv_n1_ref[...] = jax.lax.rsqrt(
            jnp.sum(a * a, axis=1, keepdims=True))                   # (tm, 1)

    # Fold the column normalization into b BEFORE the matmul: the (tn, 1)
    # rsqrt broadcasts along lanes (cheap VPU op) and no transpose is needed.
    inv_n2 = jax.lax.rsqrt(jnp.sum(b * b, axis=1, keepdims=True))    # (tn, 1)
    b_n = b * inv_n2                                                 # (tn, Dp)

    # Contract both operands on their last (lane) axis -- no explicit b.T.
    num = jax.lax.dot_general(
        a, b_n,
        dimension_numbers=(((1,), (1,)), ((), ())),
        preferred_element_type=jnp.float32)                          # (tm, tn)

    o_ref[...] = num * inv_n1_ref[...]


def cosine_similarity_pallas(x1, x2):
    """x1: (M, D), x2: (N, D) -> (M, N) pairwise cosine similarity (float32)."""
    M, D = x1.shape
    N, D2 = x2.shape
    assert D == D2, "feature dims must match"

    x1 = x1.astype(jnp.float32)
    x2 = x2.astype(jnp.float32)

    # Lane-dense, (8, 128)-aligned tile sizes; D kept fully resident per tile.
    tm = min(256, _round_up(M, 8))
    tn = min(256, _round_up(N, 128))
    Mp = _round_up(M, tm)
    Np = _round_up(N, tn)
    Dp = _round_up(D, 128)
    # TODO(synk): for very large D (>~4K f32 per 256-wide tile), add a trailing
    # 'arbitrary' K grid axis with an f32 VMEM accumulator instead of keeping D
    # resident, and re-derive tile sizes against v7x's 64 MiB VMEM.

    # Zero-pad to the tiled shapes. Padded rows/cols produce garbage (0 * inf)
    # only in padded output rows/cols, which are sliced away below.
    if (Mp, Dp) != (M, D):
        x1 = jnp.pad(x1, ((0, Mp - M), (0, Dp - D)))
    if (Np, Dp) != (N, D):
        x2 = jnp.pad(x2, ((0, Np - N), (0, Dp - D)))

    grid = (Mp // tm, Np // tn)

    out = pl.pallas_call(
        _cosine_sim_kernel,
        out_shape=jax.ShapeDtypeStruct((Mp, Np), jnp.float32),
        grid_spec=pltpu.PrefetchScalarGridSpec(
            num_scalar_prefetch=0,
            grid=grid,
            in_specs=[
                pl.BlockSpec((tm, Dp), lambda i, j: (i, 0)),
                pl.BlockSpec((tn, Dp), lambda i, j: (0, j)),
            ],
            out_specs=pl.BlockSpec((tm, tn), lambda i, j: (i, j)),
            scratch_shapes=[pltpu.VMEM((tm, 1), jnp.float32)],
        ),
        compiler_params=pltpu.CompilerParams(
            # i-tiles are independent (megacore-shardable on v7x). The j axis
            # must stay sequential per i so the inv_n1 scratch cached at j == 0
            # is valid for the rest of that row of tiles.
            dimension_semantics=("parallel", "arbitrary"),
        ),
        cost_estimate=pl.CostEstimate(
            flops=2 * Mp * Np * Dp,
            transcendentals=Mp + grid[0] * Np,
            bytes_accessed=4 * (Mp * Dp + grid[0] * Np * Dp + Mp * Np),
        ),
    )(x1, x2)

    return out[:M, :N]


def cosine_similarity_ref(x1, x2):
    x2t = x2.T
    x = x1 @ x2t
    n1 = jnp.linalg.norm(x1, axis=1)[:, None]
    n2 = jnp.linalg.norm(x2t, axis=0)[None, :]
    return x * (1.0 / (n1 @ n2))


if __name__ == "__main__":
    key = jax.random.PRNGKey(0)
    k1, k2 = jax.random.split(key)

    # Small shapes consistent with the module's (M, D) x (N, D) forward; they
    # are deliberately unaligned so the padding/tiling path is exercised.
    M, N, D = 16, 8, 32
    x1 = jax.random.normal(k1, (M, D), dtype=jnp.float32)
    x2 = jax.random.normal(k2, (N, D), dtype=jnp.float32)

    out = jax.block_until_ready(cosine_similarity_pallas(x1, x2))

    ref = cosine_similarity_ref(x1, x2)
    assert out.shape == (M, N)
    assert jnp.allclose(out, ref, atol=1e-5, rtol=1e-5), "mismatch vs reference"

    print("KERNEL_OK")
</pallas_src>

<mosaic_0001>
module attributes {stable_mosaic.version = 11 : i64} {
  func.func @_cosine_sim_kernel(%arg0: i32, %arg1: i32, %arg2: memref<16x128xf32, #tpu.memory_space<vmem>>, %arg3: memref<128x128xf32, #tpu.memory_space<vmem>>, %arg4: memref<16x128xf32, #tpu.memory_space<vmem>>, %arg5: memref<16x1xf32, #tpu.memory_space<vmem>>) attributes {dimension_semantics = [#tpu.dimension_semantics<parallel>, #tpu.dimension_semantics<arbitrary>], iteration_bounds = array<i64: 1, 1>, scalar_prefetch = 0 : i64, scratch_operands = 1 : i64, tpu.core_type = #tpu.core_type<tc>, window_params = [{transform_indices = @transform_0, window_bounds = array<i64: 16, 128>}, {transform_indices = @transform_1, window_bounds = array<i64: 128, 128>}, {transform_indices = @transform_2, window_bounds = array<i64: 16, 128>}]} {
    %c0 = arith.constant 0 : index
    %c0_0 = arith.constant 0 : index
    %0 = vector.load %arg2[%c0, %c0_0] : memref<16x128xf32, #tpu.memory_space<vmem>>, vector<16x128xf32>
    %c0_1 = arith.constant 0 : index
    %c0_2 = arith.constant 0 : index
    %1 = vector.load %arg3[%c0_1, %c0_2] : memref<128x128xf32, #tpu.memory_space<vmem>>, vector<128x128xf32>
    %c0_i32 = arith.constant 0 : i32
    %2 = arith.cmpi eq, %arg1, %c0_i32 : i32
    %3 = arith.extui %2 : i1 to i32
    %c0_i32_3 = arith.constant 0 : i32
    %4 = arith.cmpi ne, %3, %c0_i32_3 : i32
    scf.if %4 {
      %16 = arith.mulf %0, %0 : vector<16x128xf32>
      %cst_9 = arith.constant dense<0.000000e+00> : vector<16xf32>
      %17 = vector.multi_reduction <add>, %16, %cst_9 [1] : vector<16x128xf32> to vector<16xf32>
      %18 = vector.shape_cast %17 : vector<16xf32> to vector<16x1xf32>
      %19 = math.rsqrt %18 : vector<16x1xf32>
      %c0_10 = arith.constant 0 : index
      %c0_11 = arith.constant 0 : index
      %20 = vector.load %arg5[%c0_10, %c0_11] : memref<16x1xf32, #tpu.memory_space<vmem>>, vector<16x1xf32>
      tpu.vector_store %arg5[%c0_10, %c0_11], %19 {strides = array<i32>} : memref<16x1xf32, #tpu.memory_space<vmem>>, vector<16x1xf32>,
    } else {
    }
    %5 = arith.mulf %1, %1 : vector<128x128xf32>
    %cst = arith.constant dense<0.000000e+00> : vector<128xf32>
    %6 = vector.multi_reduction <add>, %5, %cst [1] : vector<128x128xf32> to vector<128xf32>
    %7 = vector.shape_cast %6 : vector<128xf32> to vector<128x1xf32>
    %8 = math.rsqrt %7 : vector<128x1xf32>
    %9 = vector.broadcast %8 : vector<128x1xf32> to vector<128x128xf32>
    %10 = arith.mulf %1, %9 : vector<128x128xf32>
    %cst_4 = arith.constant dense<0.000000e+00> : vector<16x128xf32>
    %11 = tpu.matmul %0, %10, %cst_4 {dimension_numbers = #tpu.dot_dimension_numbers<[1], [1], [0], [0], [0, 0, 1, 0], [], []>} : vector<16x128xf32>, vector<128x128xf32>, vector<16x128xf32> -> vector<16x128xf32>
    %c0_5 = arith.constant 0 : index
    %c0_6 = arith.constant 0 : index
    %12 = vector.load %arg5[%c0_5, %c0_6] : memref<16x1xf32, #tpu.memory_space<vmem>>, vector<16x1xf32>
    %13 = vector.broadcast %12 : vector<16x1xf32> to vector<16x128xf32>
    %14 = arith.mulf %11, %13 : vector<16x128xf32>
    %c0_7 = arith.constant 0 : index
    %c0_8 = arith.constant 0 : index
    %15 = vector.load %arg4[%c0_7, %c0_8] : memref<16x128xf32, #tpu.memory_space<vmem>>, vector<16x128xf32>
    tpu.vector_store %arg4[%c0_7, %c0_8], %14 {strides = array<i32>} : memref<16x128xf32, #tpu.memory_space<vmem>>, vector<16x128xf32>,
    return
  }
  func.func @transform_0(%arg0: i32, %arg1: i32) -> (i32, i32) {
    %c0_i32 = arith.constant 0 : i32
    %c0_i32_0 = arith.constant 0 : i32
    return %arg0, %c0_i32 : i32, i32
  }
  func.func @transform_1(%arg0: i32, %arg1: i32) -> (i32, i32) {
    %c0_i32 = arith.constant 0 : i32
    %c0_i32_0 = arith.constant 0 : i32
    return %c0_i32, %arg1 : i32, i32
  }
  func.func @transform_2(%arg0: i32, %arg1: i32) -> (i32, i32) {
    %c0_i32 = arith.constant 0 : i32
    return %arg0, %arg1 : i32, i32
  }
}

</mosaic_0001>

<llo_original>
// kernel: tpu_custom_call.1
$region0: #{tpu_custom_call.1}
  #allocation0 [shape = 'u32[]', space=smem, size = 0x4, offset = 0x4, fixed_abs, tag = 'smem constant byte address 0x4 - core index']
  #allocation1 [shape = 'u32[144,128]{1,0:T(1,128)}', space=vmem, size = 0x12000, scoped, tag = 'internal scratch']
  #allocation2 [shape = 'f32[16,1]{1,0:T(8,128)}', space=vmem, size = 0x2000, scoped, tag = 'scratch operand']
  %s0 = inlined_call_operand.hbm [shape: f32[16,128], index: 0, kind: input, shape index: {}]
  %s1 = inlined_call_operand.hbm [shape: f32[128,128], index: 1, kind: input, shape index: {}]
  %s2 = inlined_call_operand.hbm [shape: f32[16,128], index: 2, kind: output, shape index: {}]
  %s3 = sld [smem:[#allocation0]]
  $region30: #{tpu_custom_call.1} parent=0
    _
  %s5 = ssub.s32 1, %s3
  %s6 = scalar_select 0, %s5, %s3
  $region1: #{tpu_custom_call.1} parent=0
    #allocation3 [shape = 'u8[8192]{0}', space=vmem, size = 0x2000, scoped, tag = 'input window, operand 0, single buffered']
    #allocation4 [shape = 's32[1]{0}', space=sflag, size = 0x4, scoped, tag = 'scoped memory for tpu_custom_call.1']
    #allocation5 [shape = 's32[1]{0}', space=sflag, size = 0x4, scoped, tag = 'scoped memory for tpu_custom_call.1']
    #allocation6 [shape = 'u8[65536]{0}', space=vmem, size = 0x10000, scoped, tag = 'input window, operand 1, single buffered']
    #allocation7 [shape = 's32[1]{0}', space=sflag, size = 0x4, scoped, tag = 'scoped memory for tpu_custom_call.1']
    #allocation8 [shape = 'u8[8192]{0}', space=vmem, size = 0x2000, scoped, tag = 'output window, operand 0, single buffered']
    %7 = vsyncpa [#allocation4], 0
    %8 = vsyncpa [#allocation7], 0
    %9 = vsyncpa [#allocation5], 0
    // Predicated region
    $region2: #{tpu_custom_call.1} parent=1 // pred_check
      _
    $region3: #{tpu_custom_call.1} parent=1 // pred_check_branch
      %11 = sbr.rel (0) target = $region5
    $region4: #{tpu_custom_call.1} parent=1 // pred_region
      %s13 = ssub.s32 256, 256
      %14 = vsyncadd [#allocation4], %s13
      %s15 = sshll.u32 [#allocation3], 4
      %s16 = int_to_ptr.vmem [resolvable:$true] %s15
      %21 = dma.hbm_to_vmem [thread:$0]  %s0, 256, %s16, [#allocation4], 128, 128, 8
    $region5: #{tpu_custom_call.1} parent=1 // pred_fallthru
      _
    // Predicated region
    $region6: #{tpu_custom_call.1} parent=1 // pred_check
      _
    $region7: #{tpu_custom_call.1} parent=1 // pred_check_branch
      %23 = sbr.rel (0) target = $region9
    $region8: #{tpu_custom_call.1} parent=1 // pred_region
      %s25 = ssub.s32 2048, 2048
      %26 = vsyncadd [#allocation7], %s25
      %s27 = sshll.u32 [#allocation6], 4
      %s28 = int_to_ptr.vmem [resolvable:$true] %s27
      %33 = dma.hbm_to_vmem [thread:$0]  %s1, 2048, %s28, [#allocation7], 128, 128, 8
    $region9: #{tpu_custom_call.1} parent=1 // pred_fallthru
      _
    // Predicated region
    $region10: #{tpu_custom_call.1} parent=1 // pred_check
      _
    $region11: #{tpu_custom_call.1} parent=1 // pred_check_branch
      %35 = sbr.rel (0) target = $region13
    $region12: #{tpu_custom_call.1} parent=1 // pred_region
      %36 = dma.done [#allocation4], 256
    $region13: #{tpu_custom_call.1} parent=1 // pred_fallthru
      _
    // Predicated region
    $region14: #{tpu_custom_call.1} parent=1 // pred_check
      _
    $region15: #{tpu_custom_call.1} parent=1 // pred_check_branch
      %38 = sbr.rel (0) target = $region17
    $region16: #{tpu_custom_call.1} parent=1 // pred_region
      %39 = dma.done [#allocation7], 2048
    $region17: #{tpu_custom_call.1} parent=1 // pred_fallthru
      _
    %v40 = vld [vmem:[#allocation3] sm:$0xff]
    %v41 = vld [vmem:[#allocation3 + $0x8] sm:$0xff]
    %v42 = vld [vmem:[#allocation6] sm:$0xff]
    %v43 = vld [vmem:[#allocation6 + $0x8] sm:$0xff]
    %v44 = vld [vmem:[#allocation6 + $0x10] sm:$0xff]
    %v45 = vld [vmem:[#allocation6 + $0x18] sm:$0xff]
    %v46 = vld [vmem:[#allocation6 + $0x20] sm:$0xff]
    %v47 = vld [vmem:[#allocation6 + $0x28] sm:$0xff]
    %v48 = vld [vmem:[#allocation6 + $0x30] sm:$0xff]
    %v49 = vld [vmem:[#allocation6 + $0x38] sm:$0xff]
    %v50 = vld [vmem:[#allocation6 + $0x40] sm:$0xff]
    %v51 = vld [vmem:[#allocation6 + $0x48] sm:$0xff]
    %v52 = vld [vmem:[#allocation6 + $0x50] sm:$0xff]
    %v53 = vld [vmem:[#allocation6 + $0x58] sm:$0xff]
    %v54 = vld [vmem:[#allocation6 + $0x60] sm:$0xff]
    %v55 = vld [vmem:[#allocation6 + $0x68] sm:$0xff]
    %v56 = vld [vmem:[#allocation6 + $0x70] sm:$0xff]
    %v57 = vld [vmem:[#allocation6 + $0x78] sm:$0xff]
    %p58 = scmp.eq.s32.totalorder 0, 0
    // Predicated region
    $region18: #{tpu_custom_call.1} parent=1 // pred_check
      %p59 = pneg %p58
    $region19: #{tpu_custom_call.1} parent=1 // pred_check_branch
      %61 = sbr.rel (%p59) target = $region21
    $region20: #{tpu_custom_call.1} parent=1 // pred_region
      %v62 = vmul.f32 %v40, %v40
      %v63 = vmul.f32 %v41, %v41
      %64 = vadd.xlane.f32.xlu0 %v62
      %v65 = vpop.xlane.xlu0 %64
      %66 = vadd.xlane.f32.xlu0 %v63
      %v67 = vpop.xlane.xlu0 %66
      %v68 = vrsqrt.pop %v65
      %v69 = vrsqrt.pop %v67
      %vm70 = vcmask 7168
      %71 = vst.msk [vmem:[#allocation2] sm:$0xff] %vm70, %v68
      %72 = vst.msk [vmem:[#allocation2 + $0x8] sm:$0xff] %vm70, %v69
    $region21: #{tpu_custom_call.1} parent=1 // pred_fallthru
      _
    %v73 = vmul.f32 %v42, %v42
    %v74 = vmul.f32 %v43, %v43
    %v75 = vmul.f32 %v44, %v44
    %v76 = vmul.f32 %v45, %v45
    %v77 = vmul.f32 %v46, %v46
    %v78 = vmul.f32 %v47, %v47
    %v79 = vmul.f32 %v48, %v48
    %v80 = vmul.f32 %v49, %v49
    %v81 = vmul.f32 %v50, %v50
    %v82 = vmul.f32 %v51, %v51
    %v83 = vmul.f32 %v52, %v52
    %v84 = vmul.f32 %v53, %v53
    %v85 = vmul.f32 %v54, %v54
    %v86 = vmul.f32 %v55, %v55
    %v87 = vmul.f32 %v56, %v56
    %v88 = vmul.f32 %v57, %v57
    %89 = vadd.xlane.f32.xlu0 %v73
    %v90 = vpop.xlane.xlu0 %89
    %91 = vadd.xlane.f32.xlu0 %v74
    %v92 = vpop.xlane.xlu0 %91
    %93 = vadd.xlane.f32.xlu0 %v75
    %v94 = vpop.xlane.xlu0 %93
    %95 = vadd.xlane.f32.xlu0 %v76
    %v96 = vpop.xlane.xlu0 %95
    %97 = vadd.xlane.f32.xlu0 %v77
    %v98 = vpop.xlane.xlu0 %97
    %99 = vadd.xlane.f32.xlu0 %v78
    %v100 = vpop.xlane.xlu0 %99
    %101 = vadd.xlane.f32.xlu0 %v79
    %v102 = vpop.xlane.xlu0 %101
    %103 = vadd.xlane.f32.xlu0 %v80
    %v104 = vpop.xlane.xlu0 %103
    %105 = vadd.xlane.f32.xlu0 %v81
    %v106 = vpop.xlane.xlu0 %105
    %107 = vadd.xlane.f32.xlu0 %v82
    %v108 = vpop.xlane.xlu0 %107
    %109 = vadd.xlane.f32.xlu0 %v83
    %v110 = vpop.xlane.xlu0 %109
    %111 = vadd.xlane.f32.xlu0 %v84
    %v112 = vpop.xlane.xlu0 %111
    %113 = vadd.xlane.f32.xlu0 %v85
    %v114 = vpop.xlane.xlu0 %113
    %115 = vadd.xlane.f32.xlu0 %v86
    %v116 = vpop.xlane.xlu0 %115
    %117 = vadd.xlane.f32.xlu0 %v87
    %v118 = vpop.xlane.xlu0 %117
    %119 = vadd.xlane.f32.xlu0 %v88
    %v120 = vpop.xlane.xlu0 %119
    %v121 = vrsqrt.pop %v90
    %v122 = vrsqrt.pop %v92
    %v123 = vrsqrt.pop %v94
    %v124 = vrsqrt.pop %v96
    %v125 = vrsqrt.pop %v98
    %v126 = vrsqrt.pop %v100
    %v127 = vrsqrt.pop %v102
    %v128 = vrsqrt.pop %v104
    %v129 = vrsqrt.pop %v106
    %v130 = vrsqrt.pop %v108
    %v131 = vrsqrt.pop %v110
    %v132 = vrsqrt.pop %v112
    %v133 = vrsqrt.pop %v114
    %v134 = vrsqrt.pop %v116
    %v135 = vrsqrt.pop %v118
    %v136 = vrsqrt.pop %v120
    %v137 = vmul.f32 %v42, %v121
    %v138 = vmul.f32 %v43, %v122
    %v139 = vmul.f32 %v44, %v123
    %v140 = vmul.f32 %v45, %v124
    %v141 = vmul.f32 %v46, %v125
    %v142 = vmul.f32 %v47, %v126
    %v143 = vmul.f32 %v48, %v127
    %v144 = vmul.f32 %v49, %v128
    %v145 = vmul.f32 %v50, %v129
    %v146 = vmul.f32 %v51, %v130
    %v147 = vmul.f32 %v52, %v131
    %v148 = vmul.f32 %v53, %v132
    %v149 = vmul.f32 %v54, %v133
    %v150 = vmul.f32 %v55, %v134
    %v151 = vmul.f32 %v56, %v135
    %v152 = vmul.f32 %v57, %v136
    %153 = vmatprep.subr.mxu0 0.0
    %154 = vmatpush1.xpose.msra.mxu0 %v152
    %155 = vmatprep.subr.mxu0 0.0
    %156 = vmatpush1.xpose.msra.mxu0 %v151
    %157 = vmatprep.subr.mxu0 0.0
    %158 = vmatpush1.xpose.msra.mxu0 %v150
    %159 = vmatprep.subr.mxu0 0.0
    %160 = vmatpush1.xpose.msra.mxu0 %v149
    %161 = vmatprep.subr.mxu0 0.0
    %162 = vmatpush1.xpose.msra.mxu0 %v148
    %163 = vmatprep.subr.mxu0 0.0
    %164 = vmatpush1.xpose.msra.mxu0 %v147
    %165 = vmatprep.subr.mxu0 0.0
    %166 = vmatpush1.xpose.msra.mxu0 %v146
    %167 = vmatprep.subr.mxu0 0.0
    %168 = vmatpush1.xpose.msra.mxu0 %v145
    %169 = vmatprep.subr.mxu0 0.0
    %170 = vmatpush1.xpose.msra.mxu0 %v144
    %171 = vmatprep.subr.mxu0 0.0
    %172 = vmatpush1.xpose.msra.mxu0 %v143
    %173 = vmatprep.subr.mxu0 0.0
    %174 = vmatpush1.xpose.msra.mxu0 %v142
    %175 = vmatprep.subr.mxu0 0.0
    %176 = vmatpush1.xpose.msra.mxu0 %v141
    %177 = vmatprep.subr.mxu0 0.0
    %178 = vmatpush1.xpose.msra.mxu0 %v140
    %179 = vmatprep.subr.mxu0 0.0
    %180 = vmatpush1.xpose.msra.mxu0 %v139
    %181 = vmatprep.subr.mxu0 0.0
    %182 = vmatpush1.xpose.msra.mxu0 %v138
    %183 = vmatprep.subr.mxu0 0.0
    %184 = vmatpush1.xpose.msra.mxu0 %v137
    %185 = vmatprep.subr.mxu0 0.0
    %186 = vmatpush2.xpose.msra.mxu0 0.0
    %187 = vmatprep.subr.mxu0 0.0
    %188 = vmatpush2.xpose.msra.mxu0 0.0
    %189 = vmatprep.subr.mxu0 0.0
    %190 = vmatpush2.xpose.msra.mxu0 0.0
    %191 = vmatprep.subr.mxu0 0.0
    %192 = vmatpush2.xpose.msra.mxu0 0.0
    %193 = vmatprep.subr.mxu0 0.0
    %194 = vmatpush2.xpose.msra.mxu0 0.0
    %195 = vmatprep.subr.mxu0 0.0
    %196 = vmatpush2.xpose.msra.mxu0 0.0
    %197 = vmatprep.subr.mxu0 0.0
    %198 = vmatpush2.xpose.msra.mxu0 0.0
    %199 = vmatprep.subr.mxu0 0.0
    %200 = vmatpush2.xpose.msra.mxu0 0.0
    %201 = vmatprep.subr.mxu0 0.0
    %202 = vmatpush2.xpose.msra.mxu0 0.0
    %203 = vmatprep.subr.mxu0 0.0
    %204 = vmatpush2.xpose.msra.mxu0 0.0
    %205 = vmatprep.subr.mxu0 0.0
    %206 = vmatpush2.xpose.msra.mxu0 0.0
    %207 = vmatprep.subr.mxu0 0.0
    %208 = vmatpush2.xpose.msra.mxu0 0.0
    %209 = vmatprep.subr.mxu0 0.0
    %210 = vmatpush2.xpose.msra.mxu0 0.0
    %211 = vmatprep.subr.mxu0 0.0
    %212 = vmatpush2.xpose.msra.mxu0 0.0
    %213 = vmatprep.subr.mxu0 0.0
    %214 = vmatpush2.xpose.msra.mxu0 0.0
    %215 = vmatprep.subr.mxu0 0.0
    %216 = vmatpush2.xpose.msra.mxu0 0.0
    %217 = vmatprep.mubr.f32.mxu0 0.0
    %218 = vmatmul.mubr.f32.gmra.mxu0 %v40
    %v219 = vpop.f32.mrf.mxu0
    %v220 = vadd.f32 0.0, %v219
    %v221 = vpop.f32.mrf.mxu0
    %222 = vmatprep.mubr.f32.mxu0 0.0
    %223 = vmatmul.mubr.f32.gmra.mxu0 %v41
    %v224 = vpop.f32.mrf.mxu0
    %v225 = vadd.f32 0.0, %v224
    %v226 = vpop.f32.mrf.mxu0
    %227 = vdwg.mxu0
    %v228 = vld [vmem:[#allocation2] sm:$0xff]
    %v229 = vld [vmem:[#allocation2 + $0x8] sm:$0xff]
    %231 = vset.pattern.permute.xlu0 0
    %232 = vperm.xlu0 %231, %v228
    %v233 = vpop.permute.xlu0 %232
    %236 = vset.pattern.permute.xlu0 0
    %237 = vperm.xlu0 %236, %v229
    %v238 = vpop.permute.xlu0 %237
    %v240 = vmul.f32 %v220, %v233
    %v241 = vmul.f32 %v225, %v238
    %242 = vst [vmem:[#allocation8] sm:$0xff] %v240
    %243 = vst [vmem:[#allocation8 + $0x8] sm:$0xff] %v241
    // Predicated region
    $region22: #{tpu_custom_call.1} parent=1 // pred_check
      _
    $region23: #{tpu_custom_call.1} parent=1 // pred_check_branch
      %245 = sbr.rel (0) target = $region25
    $region24: #{tpu_custom_call.1} parent=1 // pred_region
      %s247 = ssub.s32 256, 256
      %248 = vsyncadd [#allocation5], %s247
      %s249 = sshll.u32 [#allocation8], 4
      %s250 = int_to_ptr.vmem [resolvable:$true] %s249
      %255 = dma.vmem_to_hbm [thread:$0]  %s250, 256, %s2, [#allocation5], 128, 128, 8
    $region25: #{tpu_custom_call.1} parent=1 // pred_fallthru
      _
    // Predicated region
    $region26: #{tpu_custom_call.1} parent=1 // pred_check
      _
    $region27: #{tpu_custom_call.1} parent=1 // pred_check_branch
      %257 = sbr.rel (0) target = $region29
    $region28: #{tpu_custom_call.1} parent=1 // pred_region
      %258 = dma.done [#allocation5], 256
    $region29: #{tpu_custom_call.1} parent=1 // pred_fallthru
      _
    %259 = vsyncpa [#allocation4], 1
    %260 = vsyncpa [#allocation7], 1
    %261 = vsyncpa [#allocation5], 1

</llo_original>
